<compile_context>
chip_gen: v7x
topology: tpu7x:2x2x1
jax: 0.10.0
libtpu: 0.0.40
codegen_flags: <defaults>
</compile_context>

<pallas_src>
import math
from functools import partial

import jax
import jax.numpy as jnp
from jax.experimental import pallas as pl
from jax.experimental.pallas import tpu as pltpu


def _round_up(x, m):
    return ((x + m - 1) // m) * m


def _mlp_fused_kernel(*refs, n_layers):
    # refs = (x_ref, w1, b1, w2, b2, ..., wn, bn, o_ref)
    x_ref = refs[0]
    o_ref = refs[-1]
    wb = refs[1:-1]

    h = x_ref[...]                                    # [tm, K0] f32
    for i in range(n_layers):                         # static Python loop
        w = wb[2 * i][...]                            # [K_i, N_i]  (VMEM-resident)
        b = wb[2 * i + 1][...]                        # [1,   N_i]
        h = jnp.dot(h, w, preferred_element_type=jnp.float32) + b
        if i != n_layers - 1:
            h = jnp.maximum(h, 0.0)                   # ReLU on all but last layer
    o_ref[...] = h.astype(o_ref.dtype)


def init_mlp_params(key, layers):
    """Deterministic init matching nn.Linear's default U(-1/sqrt(fan_in), +)."""
    params = []
    for i in range(len(layers) - 1):
        fan_in, fan_out = layers[i], layers[i + 1]
        key, kw, kb = jax.random.split(key, 3)
        bound = 1.0 / math.sqrt(fan_in)
        # stored transposed vs. PyTorch: [in, out] for a plain row-major matmul
        w = jax.random.uniform(kw, (fan_in, fan_out), jnp.float32, -bound, bound)
        b = jax.random.uniform(kb, (1, fan_out), jnp.float32, -bound, bound)
        params.append((w, b))
    return params


def _pad_params_lane_dense(params):
    """Zero-pad every layer's in/out feature dims (except the very first
    input dim) up to a multiple of 128 so all matmul outputs and the final
    store are lane-dense. Exact: padded rows/cols/bias are zero."""
    padded = []
    prev_out_pad = None
    for li, (w, b) in enumerate(params):
        k, n = w.shape
        k_pad = k if li == 0 else prev_out_pad
        n_pad = _round_up(n, 128)
        w_p = jnp.zeros((k_pad, n_pad), w.dtype).at[:k, :n].set(w)
        b_p = jnp.zeros((1, n_pad), b.dtype).at[:, :n].set(b)
        padded.append((w_p, b_p))
        prev_out_pad = n_pad
    return padded


def _mlp_forward_impl(params, x, *, max_tm=512):
    lead = x.shape[:-1]
    K0 = x.shape[-1]
    Nout = params[-1][0].shape[1]
    n_layers = len(params)

    # Lane-dense padding of all layer widths (kept exact via zero padding).
    params_p = _pad_params_lane_dense(params)
    Nout_pad = params_p[-1][0].shape[1]

    x2d = x.reshape(-1, K0)
    M = x2d.shape[0]

    # Row tile: multiple of 8 (sublane), capped by a VMEM-safe max_tm
    # (max_tm=512 keeps double-buffered x/out tiles + resident weights far
    # under the 32 MiB scoped-VMEM default on v5e/v6e/v7x).
    tm = min(max_tm, _round_up(M, 8))
    # Pad M up to a multiple of tm so the grid is exact (no ragged tail).
    M_pad = _round_up(M, tm)
    if M_pad != M:
        x2d = jnp.pad(x2d, ((0, M_pad - M), (0, 0)))

    grid = (M_pad // tm,)

    # BlockSpecs: x/out tiled along rows; weights/biases use constant
    # index_maps so they are fetched once and stay VMEM-resident.
    in_specs = [pl.BlockSpec((tm, K0), lambda i: (i, 0))]
    flat_wb = []
    for (w, b) in params_p:
        k, n = w.shape
        in_specs.append(pl.BlockSpec((k, n), lambda i: (0, 0)))
        in_specs.append(pl.BlockSpec((1, n), lambda i: (0, 0)))
        flat_wb += [w, b]

    flops = sum(2 * M_pad * w.shape[0] * w.shape[1] for (w, _) in params_p)
    bytes_accessed = 4 * (M_pad * K0 + M_pad * Nout_pad
                          + sum(w.size + b.size for (w, b) in params_p))

    out = pl.pallas_call(
        partial(_mlp_fused_kernel, n_layers=n_layers),
        out_shape=jax.ShapeDtypeStruct((M_pad, Nout_pad), x2d.dtype),
        grid_spec=pltpu.PrefetchScalarGridSpec(
            num_scalar_prefetch=0,
            grid=grid,
            in_specs=in_specs,
            out_specs=pl.BlockSpec((tm, Nout_pad), lambda i: (i, 0)),
        ),
        compiler_params=pltpu.CompilerParams(
            # Row tiles are independent -> shardable across v7x's 2 TCs.
            dimension_semantics=("parallel",),
        ),
        cost_estimate=pl.CostEstimate(
            flops=int(flops), transcendentals=0,
            bytes_accessed=int(bytes_accessed)),
    )(x2d, *flat_wb)

    out = out[:M, :Nout]
    return out.reshape(*lead, Nout)


# jit the wrapper so the pad/slice layout plumbing fuses around the kernel.
mlp_forward = jax.jit(_mlp_forward_impl, static_argnames=("max_tm",))


def _mlp_reference(params, x):
    lead = x.shape[:-1]
    h = x.reshape(-1, x.shape[-1])
    for i, (w, b) in enumerate(params):
        h = h @ w + b
        if i != len(params) - 1:
            h = jnp.maximum(h, 0.0)
    return h.reshape(*lead, params[-1][0].shape[1])


if __name__ == "__main__":
    key = jax.random.PRNGKey(0)
    # edge_embs: [E, G, N] = [4, 2, 32]; MLP layers [32, 64, 48, 16]
    layers = [32, 64, 48, 16]
    E, G, N = 4, 2, layers[0]

    key, kx = jax.random.split(key)
    x = jax.random.normal(kx, (E, G, N), jnp.float32)
    params = init_mlp_params(key, layers)

    out = mlp_forward(params, x)
    jax.block_until_ready(out)

    ref = _mlp_reference(params, x)
    assert out.shape == (E, G, layers[-1])
    assert jnp.allclose(out, ref, atol=1e-5), "mismatch vs reference (small)"

    # Second check: ragged row count + multi-tile grid.
    key, kx2 = jax.random.split(key)
    x2 = jax.random.normal(kx2, (70, G, N), jnp.float32)    # M = 140 rows
    out2 = mlp_forward(params, x2, max_tm=64)                # 3 row tiles
    jax.block_until_ready(out2)
    ref2 = _mlp_reference(params, x2)
    assert out2.shape == (70, G, layers[-1])
    assert jnp.allclose(out2, ref2, atol=1e-5), "mismatch vs reference (tiled)"

    print("KERNEL_OK")
</pallas_src>

<mosaic_0001>
module attributes {stable_mosaic.version = 11 : i64} {
  func.func @_mlp_fused_kernel(%arg0: i32, %arg1: memref<8x32xf32, #tpu.memory_space<vmem>>, %arg2: memref<32x128xf32, #tpu.memory_space<vmem>>, %arg3: memref<1x128xf32, #tpu.memory_space<vmem>>, %arg4: memref<128x128xf32, #tpu.memory_space<vmem>>, %arg5: memref<1x128xf32, #tpu.memory_space<vmem>>, %arg6: memref<128x128xf32, #tpu.memory_space<vmem>>, %arg7: memref<1x128xf32, #tpu.memory_space<vmem>>, %arg8: memref<8x128xf32, #tpu.memory_space<vmem>>) attributes {dimension_semantics = [#tpu.dimension_semantics<parallel>], iteration_bounds = array<i64: 1>, scalar_prefetch = 0 : i64, scratch_operands = 0 : i64, tpu.core_type = #tpu.core_type<tc>, window_params = [{transform_indices = @transform_0, window_bounds = array<i64: 8, 32>}, {pipeline_mode = #tpu.pipeline_mode<synchronous>, transform_indices = @transform_1, window_bounds = array<i64: 32, 128>}, {pipeline_mode = #tpu.pipeline_mode<synchronous>, transform_indices = @transform_2, window_bounds = array<i64: 1, 128>}, {pipeline_mode = #tpu.pipeline_mode<synchronous>, transform_indices = @transform_3, window_bounds = array<i64: 128, 128>}, {pipeline_mode = #tpu.pipeline_mode<synchronous>, transform_indices = @transform_4, window_bounds = array<i64: 1, 128>}, {pipeline_mode = #tpu.pipeline_mode<synchronous>, transform_indices = @transform_5, window_bounds = array<i64: 128, 128>}, {pipeline_mode = #tpu.pipeline_mode<synchronous>, transform_indices = @transform_6, window_bounds = array<i64: 1, 128>}, {transform_indices = @transform_7, window_bounds = array<i64: 8, 128>}]} {
    %c0 = arith.constant 0 : index
    %c0_0 = arith.constant 0 : index
    %0 = vector.load %arg1[%c0, %c0_0] : memref<8x32xf32, #tpu.memory_space<vmem>>, vector<8x32xf32>
    %c0_1 = arith.constant 0 : index
    %c0_2 = arith.constant 0 : index
    %1 = vector.load %arg2[%c0_1, %c0_2] : memref<32x128xf32, #tpu.memory_space<vmem>>, vector<32x128xf32>
    %c0_3 = arith.constant 0 : index
    %c0_4 = arith.constant 0 : index
    %2 = vector.load %arg3[%c0_3, %c0_4] : memref<1x128xf32, #tpu.memory_space<vmem>>, vector<1x128xf32>
    %cst = arith.constant dense<0.000000e+00> : vector<8x128xf32>
    %3 = tpu.matmul %0, %1, %cst {dimension_numbers = #tpu.dot_dimension_numbers<[1], [0], [0], [1], [0, 0, 1, 1], [], []>} : vector<8x32xf32>, vector<32x128xf32>, vector<8x128xf32> -> vector<8x128xf32>
    %4 = vector.broadcast %2 : vector<1x128xf32> to vector<8x128xf32>
    %5 = arith.addf %3, %4 : vector<8x128xf32>
    %cst_5 = arith.constant 0.000000e+00 : f32
    %6 = vector.broadcast %cst_5 : f32 to vector<8x128xf32>
    %7 = arith.maximumf %5, %6 : vector<8x128xf32>
    %c0_6 = arith.constant 0 : index
    %c0_7 = arith.constant 0 : index
    %8 = vector.load %arg4[%c0_6, %c0_7] : memref<128x128xf32, #tpu.memory_space<vmem>>, vector<128x128xf32>
    %c0_8 = arith.constant 0 : index
    %c0_9 = arith.constant 0 : index
    %9 = vector.load %arg5[%c0_8, %c0_9] : memref<1x128xf32, #tpu.memory_space<vmem>>, vector<1x128xf32>
    %cst_10 = arith.constant dense<0.000000e+00> : vector<8x128xf32>
    %10 = tpu.matmul %7, %8, %cst_10 {dimension_numbers = #tpu.dot_dimension_numbers<[1], [0], [0], [1], [0, 0, 1, 1], [], []>} : vector<8x128xf32>, vector<128x128xf32>, vector<8x128xf32> -> vector<8x128xf32>
    %11 = vector.broadcast %9 : vector<1x128xf32> to vector<8x128xf32>
    %12 = arith.addf %10, %11 : vector<8x128xf32>
    %cst_11 = arith.constant 0.000000e+00 : f32
    %13 = vector.broadcast %cst_11 : f32 to vector<8x128xf32>
    %14 = arith.maximumf %12, %13 : vector<8x128xf32>
    %c0_12 = arith.constant 0 : index
    %c0_13 = arith.constant 0 : index
    %15 = vector.load %arg6[%c0_12, %c0_13] : memref<128x128xf32, #tpu.memory_space<vmem>>, vector<128x128xf32>
    %c0_14 = arith.constant 0 : index
    %c0_15 = arith.constant 0 : index
    %16 = vector.load %arg7[%c0_14, %c0_15] : memref<1x128xf32, #tpu.memory_space<vmem>>, vector<1x128xf32>
    %cst_16 = arith.constant dense<0.000000e+00> : vector<8x128xf32>
    %17 = tpu.matmul %14, %15, %cst_16 {dimension_numbers = #tpu.dot_dimension_numbers<[1], [0], [0], [1], [0, 0, 1, 1], [], []>} : vector<8x128xf32>, vector<128x128xf32>, vector<8x128xf32> -> vector<8x128xf32>
    %18 = vector.broadcast %16 : vector<1x128xf32> to vector<8x128xf32>
    %19 = arith.addf %17, %18 : vector<8x128xf32>
    %c0_17 = arith.constant 0 : index
    %c0_18 = arith.constant 0 : index
    %20 = vector.load %arg8[%c0_17, %c0_18] : memref<8x128xf32, #tpu.memory_space<vmem>>, vector<8x128xf32>
    tpu.vector_store %arg8[%c0_17, %c0_18], %19 {strides = array<i32>} : memref<8x128xf32, #tpu.memory_space<vmem>>, vector<8x128xf32>,
    return
  }
  func.func @transform_0(%arg0: i32) -> (i32, i32) {
    %c0_i32 = arith.constant 0 : i32
    %c0_i32_0 = arith.constant 0 : i32
    return %arg0, %c0_i32 : i32, i32
  }
  func.func @transform_1(%arg0: i32) -> (i32, i32) {
    %c0_i32 = arith.constant 0 : i32
    %c0_i32_0 = arith.constant 0 : i32
    %c0_i32_1 = arith.constant 0 : i32
    return %c0_i32, %c0_i32_0 : i32, i32
  }
  func.func @transform_2(%arg0: i32) -> (i32, i32) {
    %c0_i32 = arith.constant 0 : i32
    %c0_i32_0 = arith.constant 0 : i32
    %c0_i32_1 = arith.constant 0 : i32
    return %c0_i32, %c0_i32_0 : i32, i32
  }
  func.func @transform_3(%arg0: i32) -> (i32, i32) {
    %c0_i32 = arith.constant 0 : i32
    %c0_i32_0 = arith.constant 0 : i32
    %c0_i32_1 = arith.constant 0 : i32
    return %c0_i32, %c0_i32_0 : i32, i32
  }
  func.func @transform_4(%arg0: i32) -> (i32, i32) {
    %c0_i32 = arith.constant 0 : i32
    %c0_i32_0 = arith.constant 0 : i32
    %c0_i32_1 = arith.constant 0 : i32
    return %c0_i32, %c0_i32_0 : i32, i32
  }
  func.func @transform_5(%arg0: i32) -> (i32, i32) {
    %c0_i32 = arith.constant 0 : i32
    %c0_i32_0 = arith.constant 0 : i32
    %c0_i32_1 = arith.constant 0 : i32
    return %c0_i32, %c0_i32_0 : i32, i32
  }
  func.func @transform_6(%arg0: i32) -> (i32, i32) {
    %c0_i32 = arith.constant 0 : i32
    %c0_i32_0 = arith.constant 0 : i32
    %c0_i32_1 = arith.constant 0 : i32
    return %c0_i32, %c0_i32_0 : i32, i32
  }
  func.func @transform_7(%arg0: i32) -> (i32, i32) {
    %c0_i32 = arith.constant 0 : i32
    %c0_i32_0 = arith.constant 0 : i32
    return %arg0, %c0_i32 : i32, i32
  }
}

</mosaic_0001>

<llo_original>
// kernel: _mlp_forward_impl.1
$region0: #{_mlp_forward_impl.1}
  #allocation0 [shape = 'u32[]', space=smem, size = 0x4, offset = 0x4, fixed_abs, tag = 'smem constant byte address 0x4 - core index']
  #allocation1 [shape = 'u32[144,128]{1,0:T(1,128)}', space=vmem, size = 0x12000, scoped, tag = 'internal scratch']
  %s0 = inlined_call_operand.vmem [shape: f32[8,32], index: 0, kind: input, shape index: {}]
  %s1 = inlined_call_operand.vmem [shape: f32[32,128], index: 1, kind: input, shape index: {}]
  %s2 = inlined_call_operand.vmem [shape: f32[1,128], index: 2, kind: input, shape index: {}]
  %s3 = inlined_call_operand.vmem [shape: f32[128,128], index: 3, kind: input, shape index: {}]
  %s4 = inlined_call_operand.vmem [shape: f32[1,128], index: 4, kind: input, shape index: {}]
  %s5 = inlined_call_operand.vmem [shape: f32[128,128], index: 5, kind: input, shape index: {}]
  %s6 = inlined_call_operand.vmem [shape: f32[1,128], index: 6, kind: input, shape index: {}]
  %s7 = inlined_call_operand.hbm [shape: f32[8,128], index: 7, kind: output, shape index: {}]
  %s8 = sld [smem:[#allocation0]]
  $region38: #{_mlp_forward_impl.1} parent=0
    _
  %s10 = ssub.s32 1, %s8
  %s11 = scalar_select 0, %s10, %s8
  $region1: #{_mlp_forward_impl.1} parent=0
    #allocation2 [shape = 'u8[4096]{0}', space=vmem, size = 0x1000, scoped, tag = 'output window, operand 0, single buffered']
    #allocation3 [shape = 's32[1]{0}', space=sflag, size = 0x4, scoped, tag = 'scoped memory for _mlp_forward_impl.1']
    %12 = vsyncpa [#allocation3], 0
    // Predicated region
    $region2: #{_mlp_forward_impl.1} parent=1 // pred_check
      _
    $region3: #{_mlp_forward_impl.1} parent=1 // pred_check_branch
      %14 = sbr.rel (0) target = $region5
    $region4: #{_mlp_forward_impl.1} parent=1 // pred_region
      _
    $region5: #{_mlp_forward_impl.1} parent=1 // pred_fallthru
      _
    // Predicated region
    $region6: #{_mlp_forward_impl.1} parent=1 // pred_check
      _
    $region7: #{_mlp_forward_impl.1} parent=1 // pred_check_branch
      %16 = sbr.rel (0) target = $region9
    $region8: #{_mlp_forward_impl.1} parent=1 // pred_region
      _
    $region9: #{_mlp_forward_impl.1} parent=1 // pred_fallthru
      _
    // Predicated region
    $region10: #{_mlp_forward_impl.1} parent=1 // pred_check
      _
    $region11: #{_mlp_forward_impl.1} parent=1 // pred_check_branch
      %18 = sbr.rel (0) target = $region13
    $region12: #{_mlp_forward_impl.1} parent=1 // pred_region
      _
    $region13: #{_mlp_forward_impl.1} parent=1 // pred_fallthru
      _
    // Predicated region
    $region14: #{_mlp_forward_impl.1} parent=1 // pred_check
      _
    $region15: #{_mlp_forward_impl.1} parent=1 // pred_check_branch
      %20 = sbr.rel (0) target = $region17
    $region16: #{_mlp_forward_impl.1} parent=1 // pred_region
      _
    $region17: #{_mlp_forward_impl.1} parent=1 // pred_fallthru
      _
    // Predicated region
    $region18: #{_mlp_forward_impl.1} parent=1 // pred_check
      _
    $region19: #{_mlp_forward_impl.1} parent=1 // pred_check_branch
      %22 = sbr.rel (0) target = $region21
    $region20: #{_mlp_forward_impl.1} parent=1 // pred_region
      _
    $region21: #{_mlp_forward_impl.1} parent=1 // pred_fallthru
      _
    // Predicated region
    $region22: #{_mlp_forward_impl.1} parent=1 // pred_check
      _
    $region23: #{_mlp_forward_impl.1} parent=1 // pred_check_branch
      %24 = sbr.rel (0) target = $region25
    $region24: #{_mlp_forward_impl.1} parent=1 // pred_region
      _
    $region25: #{_mlp_forward_impl.1} parent=1 // pred_fallthru
      _
    // Predicated region
    $region26: #{_mlp_forward_impl.1} parent=1 // pred_check
      _
    $region27: #{_mlp_forward_impl.1} parent=1 // pred_check_branch
      %26 = sbr.rel (0) target = $region29
    $region28: #{_mlp_forward_impl.1} parent=1 // pred_region
      _
    $region29: #{_mlp_forward_impl.1} parent=1 // pred_fallthru
      _
    %v27 = vld [vmem:[%s0] sm:$0xff]
    %v28 = vld [vmem:[%s1] sm:$0xff]
    %v29 = vld [vmem:[%s1 + $0x8] sm:$0xff]
    %v30 = vld [vmem:[%s1 + $0x10] sm:$0xff]
    %v31 = vld [vmem:[%s1 + $0x18] sm:$0xff]
    %v32 = vld [vmem:[%s2] sm:$0x1]
    %v34 = vlaneseq
    %v35 = vshrl.u32 %v34, 7
    %v36 = vsub.s32 0, %v35
    %v37 = vrot.slane %v32, %v36
    %vm39 = vcmask 261120
    %v41 = vsel %vm39, %v27, 0
    %43 = vmatprep.subr.mxu0 0.0
    %44 = vmatpush1.msra.mxu0 %v28
    %45 = vmatprep.subr.mxu0 0.0
    %46 = vmatpush1.msra.mxu0 %v29
    %47 = vmatprep.subr.mxu0 0.0
    %48 = vmatpush1.msra.mxu0 %v30
    %49 = vmatprep.subr.mxu0 0.0
    %50 = vmatpush1.msra.mxu0 %v31
    %51 = vmatprep.subr.mxu0 0.0
    %52 = vmatpush1.msra.mxu0 0.0
    %53 = vmatprep.subr.mxu0 0.0
    %54 = vmatpush1.msra.mxu0 0.0
    %55 = vmatprep.subr.mxu0 0.0
    %56 = vmatpush1.msra.mxu0 0.0
    %57 = vmatprep.subr.mxu0 0.0
    %58 = vmatpush1.msra.mxu0 0.0
    %59 = vmatprep.subr.mxu0 0.0
    %60 = vmatpush1.msra.mxu0 0.0
    %61 = vmatprep.subr.mxu0 0.0
    %62 = vmatpush1.msra.mxu0 0.0
    %63 = vmatprep.subr.mxu0 0.0
    %64 = vmatpush1.msra.mxu0 0.0
    %65 = vmatprep.subr.mxu0 0.0
    %66 = vmatpush1.msra.mxu0 0.0
    %67 = vmatprep.subr.mxu0 0.0
    %68 = vmatpush1.msra.mxu0 0.0
    %69 = vmatprep.subr.mxu0 0.0
    %70 = vmatpush1.msra.mxu0 0.0
    %71 = vmatprep.subr.mxu0 0.0
    %72 = vmatpush1.msra.mxu0 0.0
    %73 = vmatprep.subr.mxu0 0.0
    %74 = vmatpush1.msra.mxu0 0.0
    %75 = vmatprep.subr.mxu0 0.0
    %76 = vmatpush1.msra.mxu0 0.0
    %77 = vmatprep.subr.mxu0 0.0
    %78 = vmatpush1.msra.mxu0 0.0
    %79 = vmatprep.subr.mxu0 0.0
    %80 = vmatpush1.msra.mxu0 0.0
    %81 = vmatprep.subr.mxu0 0.0
    %82 = vmatpush1.msra.mxu0 0.0
    %83 = vmatprep.subr.mxu0 0.0
    %84 = vmatpush1.msra.mxu0 0.0
    %85 = vmatprep.subr.mxu0 0.0
    %86 = vmatpush1.msra.mxu0 0.0
    %87 = vmatprep.subr.mxu0 0.0
    %88 = vmatpush1.msra.mxu0 0.0
    %89 = vmatprep.subr.mxu0 0.0
    %90 = vmatpush1.msra.mxu0 0.0
    %91 = vmatprep.subr.mxu0 0.0
    %92 = vmatpush1.msra.mxu0 0.0
    %93 = vmatprep.subr.mxu0 0.0
    %94 = vmatpush1.msra.mxu0 0.0
    %95 = vmatprep.subr.mxu0 0.0
    %96 = vmatpush1.msra.mxu0 0.0
    %97 = vmatprep.subr.mxu0 0.0
    %98 = vmatpush1.msra.mxu0 0.0
    %99 = vmatprep.subr.mxu0 0.0
    %100 = vmatpush1.msra.mxu0 0.0
    %101 = vmatprep.subr.mxu0 0.0
    %102 = vmatpush1.msra.mxu0 0.0
    %103 = vmatprep.subr.mxu0 0.0
    %104 = vmatpush1.msra.mxu0 0.0
    %105 = vmatprep.subr.mxu0 0.0
    %106 = vmatpush1.msra.mxu0 0.0
    %107 = vmatprep.mubr.f32.mxu0 0.0
    %108 = vmatmul.mubr.f32.gmra.mrb[0].mxu0 %v41
    %v109 = vpop.f32.mrb[0].mxu0
    %v110 = vadd.f32 %v37, %v109
    %v111 = vpop.f32.mrb[0].mxu0
    %112 = vdwg.mxu0
    %v113 = vmax.f32 %v110, 0.0
    %v114 = vld [vmem:[%s3] sm:$0xff]
    %v115 = vld [vmem:[%s3 + $0x8] sm:$0xff]
    %v116 = vld [vmem:[%s3 + $0x10] sm:$0xff]
    %v117 = vld [vmem:[%s3 + $0x18] sm:$0xff]
    %v118 = vld [vmem:[%s3 + $0x20] sm:$0xff]
    %v119 = vld [vmem:[%s3 + $0x28] sm:$0xff]
    %v120 = vld [vmem:[%s3 + $0x30] sm:$0xff]
    %v121 = vld [vmem:[%s3 + $0x38] sm:$0xff]
    %v122 = vld [vmem:[%s3 + $0x40] sm:$0xff]
    %v123 = vld [vmem:[%s3 + $0x48] sm:$0xff]
    %v124 = vld [vmem:[%s3 + $0x50] sm:$0xff]
    %v125 = vld [vmem:[%s3 + $0x58] sm:$0xff]
    %v126 = vld [vmem:[%s3 + $0x60] sm:$0xff]
    %v127 = vld [vmem:[%s3 + $0x68] sm:$0xff]
    %v128 = vld [vmem:[%s3 + $0x70] sm:$0xff]
    %v129 = vld [vmem:[%s3 + $0x78] sm:$0xff]
    %v130 = vld [vmem:[%s4] sm:$0x1]
    %v132 = vlaneseq
    %v133 = vshrl.u32 %v132, 7
    %v134 = vsub.s32 0, %v133
    %v135 = vrot.slane %v130, %v134
    %137 = vmatprep.subr.mxu0 0.0
    %138 = vmatpush1.msra.mxu0 %v114
    %139 = vmatprep.subr.mxu0 0.0
    %140 = vmatpush1.msra.mxu0 %v115
    %141 = vmatprep.subr.mxu0 0.0
    %142 = vmatpush1.msra.mxu0 %v116
    %143 = vmatprep.subr.mxu0 0.0
    %144 = vmatpush1.msra.mxu0 %v117
    %145 = vmatprep.subr.mxu0 0.0
    %146 = vmatpush1.msra.mxu0 %v118
    %147 = vmatprep.subr.mxu0 0.0
    %148 = vmatpush1.msra.mxu0 %v119
    %149 = vmatprep.subr.mxu0 0.0
    %150 = vmatpush1.msra.mxu0 %v120
    %151 = vmatprep.subr.mxu0 0.0
    %152 = vmatpush1.msra.mxu0 %v121
    %153 = vmatprep.subr.mxu0 0.0
    %154 = vmatpush1.msra.mxu0 %v122
    %155 = vmatprep.subr.mxu0 0.0
    %156 = vmatpush1.msra.mxu0 %v123
    %157 = vmatprep.subr.mxu0 0.0
    %158 = vmatpush1.msra.mxu0 %v124
    %159 = vmatprep.subr.mxu0 0.0
    %160 = vmatpush1.msra.mxu0 %v125
    %161 = vmatprep.subr.mxu0 0.0
    %162 = vmatpush1.msra.mxu0 %v126
    %163 = vmatprep.subr.mxu0 0.0
    %164 = vmatpush1.msra.mxu0 %v127
    %165 = vmatprep.subr.mxu0 0.0
    %166 = vmatpush1.msra.mxu0 %v128
    %167 = vmatprep.subr.mxu0 0.0
    %168 = vmatpush1.msra.mxu0 %v129
    %169 = vmatprep.subr.mxu0 0.0
    %170 = vmatpush1.msra.mxu0 0.0
    %171 = vmatprep.subr.mxu0 0.0
    %172 = vmatpush1.msra.mxu0 0.0
    %173 = vmatprep.subr.mxu0 0.0
    %174 = vmatpush1.msra.mxu0 0.0
    %175 = vmatprep.subr.mxu0 0.0
    %176 = vmatpush1.msra.mxu0 0.0
    %177 = vmatprep.subr.mxu0 0.0
    %178 = vmatpush1.msra.mxu0 0.0
    %179 = vmatprep.subr.mxu0 0.0
    %180 = vmatpush1.msra.mxu0 0.0
    %181 = vmatprep.subr.mxu0 0.0
    %182 = vmatpush1.msra.mxu0 0.0
    %183 = vmatprep.subr.mxu0 0.0
    %184 = vmatpush1.msra.mxu0 0.0
    %185 = vmatprep.subr.mxu0 0.0
    %186 = vmatpush1.msra.mxu0 0.0
    %187 = vmatprep.subr.mxu0 0.0
    %188 = vmatpush1.msra.mxu0 0.0
    %189 = vmatprep.subr.mxu0 0.0
    %190 = vmatpush1.msra.mxu0 0.0
    %191 = vmatprep.subr.mxu0 0.0
    %192 = vmatpush1.msra.mxu0 0.0
    %193 = vmatprep.subr.mxu0 0.0
    %194 = vmatpush1.msra.mxu0 0.0
    %195 = vmatprep.subr.mxu0 0.0
    %196 = vmatpush1.msra.mxu0 0.0
    %197 = vmatprep.subr.mxu0 0.0
    %198 = vmatpush1.msra.mxu0 0.0
    %199 = vmatprep.subr.mxu0 0.0
    %200 = vmatpush1.msra.mxu0 0.0
    %201 = vmatprep.mubr.f32.mxu0 0.0
    %202 = vmatmul.mubr.f32.gmra.mrb[0].mxu0 %v113
    %v203 = vpop.f32.mrb[0].mxu0
    %v204 = vadd.f32 %v135, %v203
    %v205 = vpop.f32.mrb[0].mxu0
    %206 = vdwg.mxu0
    %v207 = vmax.f32 %v204, 0.0
    %v208 = vld [vmem:[%s5] sm:$0xff]
    %v209 = vld [vmem:[%s5 + $0x8] sm:$0xff]
    %v210 = vld [vmem:[%s5 + $0x10] sm:$0xff]
    %v211 = vld [vmem:[%s5 + $0x18] sm:$0xff]
    %v212 = vld [vmem:[%s5 + $0x20] sm:$0xff]
    %v213 = vld [vmem:[%s5 + $0x28] sm:$0xff]
    %v214 = vld [vmem:[%s5 + $0x30] sm:$0xff]
    %v215 = vld [vmem:[%s5 + $0x38] sm:$0xff]
    %v216 = vld [vmem:[%s5 + $0x40] sm:$0xff]
    %v217 = vld [vmem:[%s5 + $0x48] sm:$0xff]
    %v218 = vld [vmem:[%s5 + $0x50] sm:$0xff]
    %v219 = vld [vmem:[%s5 + $0x58] sm:$0xff]
    %v220 = vld [vmem:[%s5 + $0x60] sm:$0xff]
    %v221 = vld [vmem:[%s5 + $0x68] sm:$0xff]
    %v222 = vld [vmem:[%s5 + $0x70] sm:$0xff]
    %v223 = vld [vmem:[%s5 + $0x78] sm:$0xff]
    %v224 = vld [vmem:[%s6] sm:$0x1]
    %v226 = vlaneseq
    %v227 = vshrl.u32 %v226, 7
    %v228 = vsub.s32 0, %v227
    %v229 = vrot.slane %v224, %v228
    %231 = vmatprep.subr.mxu0 0.0
    %232 = vmatpush1.msra.mxu0 %v208
    %233 = vmatprep.subr.mxu0 0.0
    %234 = vmatpush1.msra.mxu0 %v209
    %235 = vmatprep.subr.mxu0 0.0
    %236 = vmatpush1.msra.mxu0 %v210
    %237 = vmatprep.subr.mxu0 0.0
    %238 = vmatpush1.msra.mxu0 %v211
    %239 = vmatprep.subr.mxu0 0.0
    %240 = vmatpush1.msra.mxu0 %v212
    %241 = vmatprep.subr.mxu0 0.0
    %242 = vmatpush1.msra.mxu0 %v213
    %243 = vmatprep.subr.mxu0 0.0
    %244 = vmatpush1.msra.mxu0 %v214
    %245 = vmatprep.subr.mxu0 0.0
    %246 = vmatpush1.msra.mxu0 %v215
    %247 = vmatprep.subr.mxu0 0.0
    %248 = vmatpush1.msra.mxu0 %v216
    %249 = vmatprep.subr.mxu0 0.0
    %250 = vmatpush1.msra.mxu0 %v217
    %251 = vmatprep.subr.mxu0 0.0
    %252 = vmatpush1.msra.mxu0 %v218
    %253 = vmatprep.subr.mxu0 0.0
    %254 = vmatpush1.msra.mxu0 %v219
    %255 = vmatprep.subr.mxu0 0.0
    %256 = vmatpush1.msra.mxu0 %v220
    %257 = vmatprep.subr.mxu0 0.0
    %258 = vmatpush1.msra.mxu0 %v221
    %259 = vmatprep.subr.mxu0 0.0
    %260 = vmatpush1.msra.mxu0 %v222
    %261 = vmatprep.subr.mxu0 0.0
    %262 = vmatpush1.msra.mxu0 %v223
    %263 = vmatprep.subr.mxu0 0.0
    %264 = vmatpush1.msra.mxu0 0.0
    %265 = vmatprep.subr.mxu0 0.0
    %266 = vmatpush1.msra.mxu0 0.0
    %267 = vmatprep.subr.mxu0 0.0
    %268 = vmatpush1.msra.mxu0 0.0
    %269 = vmatprep.subr.mxu0 0.0
    %270 = vmatpush1.msra.mxu0 0.0
    %271 = vmatprep.subr.mxu0 0.0
    %272 = vmatpush1.msra.mxu0 0.0
    %273 = vmatprep.subr.mxu0 0.0
    %274 = vmatpush1.msra.mxu0 0.0
    %275 = vmatprep.subr.mxu0 0.0
    %276 = vmatpush1.msra.mxu0 0.0
    %277 = vmatprep.subr.mxu0 0.0
    %278 = vmatpush1.msra.mxu0 0.0
    %279 = vmatprep.subr.mxu0 0.0
    %280 = vmatpush1.msra.mxu0 0.0
    %281 = vmatprep.subr.mxu0 0.0
    %282 = vmatpush1.msra.mxu0 0.0
    %283 = vmatprep.subr.mxu0 0.0
    %284 = vmatpush1.msra.mxu0 0.0
    %285 = vmatprep.subr.mxu0 0.0
    %286 = vmatpush1.msra.mxu0 0.0
    %287 = vmatprep.subr.mxu0 0.0
    %288 = vmatpush1.msra.mxu0 0.0
    %289 = vmatprep.subr.mxu0 0.0
    %290 = vmatpush1.msra.mxu0 0.0
    %291 = vmatprep.subr.mxu0 0.0
    %292 = vmatpush1.msra.mxu0 0.0
    %293 = vmatprep.subr.mxu0 0.0
    %294 = vmatpush1.msra.mxu0 0.0
    %295 = vmatprep.mubr.f32.mxu0 0.0
    %296 = vmatmul.mubr.f32.gmra.mrb[0].mxu0 %v207
    %v297 = vpop.f32.mrb[0].mxu0
    %v298 = vadd.f32 %v229, %v297
    %v299 = vpop.f32.mrb[0].mxu0
    %300 = vdwg.mxu0
    %301 = vst [vmem:[#allocation2] sm:$0xff] %v298
    // Predicated region
    $region30: #{_mlp_forward_impl.1} parent=1 // pred_check
      _
    $region31: #{_mlp_forward_impl.1} parent=1 // pred_check_branch
      %303 = sbr.rel (0) target = $region33
    $region32: #{_mlp_forward_impl.1} parent=1 // pred_region
      %s305 = ssub.s32 128, 128
      %306 = vsyncadd [#allocation3], %s305
      %s308 = sshll.u32 [#allocation2], 4
      %s309 = int_to_ptr.vmem [resolvable:$true] %s308
      %311 = dma.vmem_to_hbm [thread:$0]  %s309, 128, %s7, [#allocation3]
    $region33: #{_mlp_forward_impl.1} parent=1 // pred_fallthru
      _
    // Predicated region
    $region34: #{_mlp_forward_impl.1} parent=1 // pred_check
      _
    $region35: #{_mlp_forward_impl.1} parent=1 // pred_check_branch
      %313 = sbr.rel (0) target = $region37
    $region36: #{_mlp_forward_impl.1} parent=1 // pred_region
      %314 = dma.done [#allocation3], 128
    $region37: #{_mlp_forward_impl.1} parent=1 // pred_fallthru
      _
    %315 = vsyncpa [#allocation3], 1

</llo_original>
